<compile_context>
chip_gen: v7x
topology: tpu7x:2x2x1
jax: 0.10.0
libtpu: 0.0.40
codegen_flags: <defaults>
</compile_context>

<pallas_src>
import functools

import jax
import jax.numpy as jnp
from jax.experimental import pallas as pl
from jax.experimental.pallas import tpu as pltpu


_LANE = 128
_VMEM_LIMIT_BYTES = 48 * 1024 * 1024          # < 64 MiB physical on v7x
_SINGLE_PASS_MAX_BLOCK_ELEMS = 1 << 20        # max M*tc f32 elems per column slab


def _round_up(v, m):
    return (v + m - 1) // m * m


def _choose_tc(c_pad):
    for cand in (512, 256, 128):
        if c_pad % cand == 0:
            return cand
    return c_pad  # unreachable: c_pad is always a multiple of 128


def _pad_cols(a, c_pad):
    c = a.shape[-1]
    if c_pad == c:
        return a
    return jnp.pad(a, ((0, 0), (0, c_pad - c)))


# ----------------------------------------------------------------------------
# Single-pass fused kernel: whole M resident per feature tile (grid over C).
# ----------------------------------------------------------------------------
def _fused_bn_kernel(bs_ref, x_ref, gib_ref, bib_ref, gob_ref, bob_ref, o_ref, *, eps):
    m = x_ref.shape[0]
    x = x_ref[...].astype(jnp.float32)                       # (m, tc)
    bs = bs_ref[0]

    row = jax.lax.broadcasted_iota(jnp.int32, x.shape, 0)    # (m, tc)
    is_ib = row < bs

    n_ib_i = jnp.clip(bs, 0, m)
    n_ib = jnp.maximum(n_ib_i, 1).astype(jnp.float32)        # guard empty segment
    n_ob = jnp.maximum(m - n_ib_i, 1).astype(jnp.float32)

    x_ib = jnp.where(is_ib, x, 0.0)
    x_ob = x - x_ib
    mean_ib = jnp.sum(x_ib, axis=0, keepdims=True) / n_ib    # (1, tc)
    mean_ob = jnp.sum(x_ob, axis=0, keepdims=True) / n_ob

    d_ib = jnp.where(is_ib, x - mean_ib, 0.0)
    d_ob = jnp.where(is_ib, 0.0, x - mean_ob)
    var_ib = jnp.sum(d_ib * d_ib, axis=0, keepdims=True) / n_ib   # biased var
    var_ob = jnp.sum(d_ob * d_ob, axis=0, keepdims=True) / n_ob

    scale_ib = jax.lax.rsqrt(var_ib + eps) * gib_ref[...].astype(jnp.float32)
    shift_ib = bib_ref[...].astype(jnp.float32) - mean_ib * scale_ib
    scale_ob = jax.lax.rsqrt(var_ob + eps) * gob_ref[...].astype(jnp.float32)
    shift_ob = bob_ref[...].astype(jnp.float32) - mean_ob * scale_ob

    scale = jnp.where(is_ib, scale_ib, scale_ob)
    shift = jnp.where(is_ib, shift_ib, shift_ob)
    o_ref[...] = (x * scale + shift).astype(o_ref.dtype)


def _single_pass(x, gib, bib, gob, bob, bs_arr, *, eps, tc):
    m, c_pad = x.shape
    n_c = c_pad // tc
    kernel = functools.partial(_fused_bn_kernel, eps=eps)
    param_spec = pl.BlockSpec((1, tc), lambda i, bs: (0, i))
    return pl.pallas_call(
        kernel,
        out_shape=jax.ShapeDtypeStruct((m, c_pad), x.dtype),
        grid_spec=pltpu.PrefetchScalarGridSpec(
            num_scalar_prefetch=1,
            grid=(n_c,),
            in_specs=[
                pl.BlockSpec((m, tc), lambda i, bs: (0, i)),
                param_spec, param_spec, param_spec, param_spec,
            ],
            out_specs=pl.BlockSpec((m, tc), lambda i, bs: (0, i)),
        ),
        compiler_params=pltpu.CompilerParams(
            dimension_semantics=("parallel",),
            vmem_limit_bytes=_VMEM_LIMIT_BYTES,
        ),
    )(bs_arr, x, gib, bib, gob, bob)


# ----------------------------------------------------------------------------
# Two-pass path for large M: (1) accumulate masked sum / sumsq over row tiles
# and finalize per-feature scale/shift, (2) apply y = x*scale + shift.
# ----------------------------------------------------------------------------
def _stats_kernel(bs_ref, x_ref, gib_ref, bib_ref, gob_ref, bob_ref,
                  aib_ref, cib_ref, aob_ref, cob_ref,
                  sib, qib, sob, qob, *, eps, block_rows, n_rows):
    j = pl.program_id(1)

    @pl.when(j == 0)
    def _init():
        sib[...] = jnp.zeros_like(sib)
        qib[...] = jnp.zeros_like(qib)
        sob[...] = jnp.zeros_like(sob)
        qob[...] = jnp.zeros_like(qob)

    x = x_ref[...].astype(jnp.float32)                        # (tm, tc)
    bs = bs_ref[0]
    row = j * block_rows + jax.lax.broadcasted_iota(jnp.int32, x.shape, 0)
    valid = row < n_rows                                      # mask ragged row padding
    is_ib = jnp.logical_and(valid, row < bs)
    is_ob = jnp.logical_and(valid, row >= bs)
    x_ib = jnp.where(is_ib, x, 0.0)
    x_ob = jnp.where(is_ob, x, 0.0)
    sib[...] += jnp.sum(x_ib, axis=0, keepdims=True)
    qib[...] += jnp.sum(x_ib * x_ib, axis=0, keepdims=True)
    sob[...] += jnp.sum(x_ob, axis=0, keepdims=True)
    qob[...] += jnp.sum(x_ob * x_ob, axis=0, keepdims=True)

    @pl.when(j == pl.num_programs(1) - 1)
    def _finalize():
        n_ib_i = jnp.clip(bs, 0, n_rows)
        n_ib = jnp.maximum(n_ib_i, 1).astype(jnp.float32)
        n_ob = jnp.maximum(n_rows - n_ib_i, 1).astype(jnp.float32)
        mean_ib = sib[...] / n_ib
        mean_ob = sob[...] / n_ob
        var_ib = jnp.maximum(qib[...] / n_ib - mean_ib * mean_ib, 0.0)
        var_ob = jnp.maximum(qob[...] / n_ob - mean_ob * mean_ob, 0.0)
        scale_ib = jax.lax.rsqrt(var_ib + eps) * gib_ref[...].astype(jnp.float32)
        scale_ob = jax.lax.rsqrt(var_ob + eps) * gob_ref[...].astype(jnp.float32)
        aib_ref[...] = scale_ib
        cib_ref[...] = bib_ref[...].astype(jnp.float32) - mean_ib * scale_ib
        aob_ref[...] = scale_ob
        cob_ref[...] = bob_ref[...].astype(jnp.float32) - mean_ob * scale_ob


def _apply_kernel(bs_ref, x_ref, aib_ref, cib_ref, aob_ref, cob_ref, o_ref, *, block_rows):
    i = pl.program_id(0)
    x = x_ref[...].astype(jnp.float32)                        # (tm, tc)
    row = i * block_rows + jax.lax.broadcasted_iota(jnp.int32, x.shape, 0)
    is_ib = row < bs_ref[0]
    scale = jnp.where(is_ib, aib_ref[...], aob_ref[...])
    shift = jnp.where(is_ib, cib_ref[...], cob_ref[...])
    o_ref[...] = (x * scale + shift).astype(o_ref.dtype)


def _two_pass(x, gib, bib, gob, bob, bs_arr, *, eps, tc, block_rows):
    m, c_pad = x.shape
    n_c = c_pad // tc
    n_m = pl.cdiv(m, block_rows)

    stats_kernel = functools.partial(_stats_kernel, eps=eps,
                                     block_rows=block_rows, n_rows=m)
    param_spec = pl.BlockSpec((1, tc), lambda i, j, bs: (0, i))
    scale_ib, shift_ib, scale_ob, shift_ob = pl.pallas_call(
        stats_kernel,
        out_shape=tuple(jax.ShapeDtypeStruct((1, c_pad), jnp.float32) for _ in range(4)),
        grid_spec=pltpu.PrefetchScalarGridSpec(
            num_scalar_prefetch=1,
            grid=(n_c, n_m),
            in_specs=[
                pl.BlockSpec((block_rows, tc), lambda i, j, bs: (j, i)),
                param_spec, param_spec, param_spec, param_spec,
            ],
            out_specs=tuple(pl.BlockSpec((1, tc), lambda i, j, bs: (0, i))
                            for _ in range(4)),
            scratch_shapes=[pltpu.VMEM((1, tc), jnp.float32) for _ in range(4)],
        ),
        compiler_params=pltpu.CompilerParams(
            dimension_semantics=("parallel", "arbitrary"),
            vmem_limit_bytes=_VMEM_LIMIT_BYTES,
        ),
    )(bs_arr, x, gib, bib, gob, bob)

    apply_kernel = functools.partial(_apply_kernel, block_rows=block_rows)
    coef_spec = pl.BlockSpec((1, tc), lambda i, j, bs: (0, j))
    return pl.pallas_call(
        apply_kernel,
        out_shape=jax.ShapeDtypeStruct((m, c_pad), x.dtype),
        grid_spec=pltpu.PrefetchScalarGridSpec(
            num_scalar_prefetch=1,
            grid=(n_m, n_c),
            in_specs=[
                pl.BlockSpec((block_rows, tc), lambda i, j, bs: (i, j)),
                coef_spec, coef_spec, coef_spec, coef_spec,
            ],
            out_specs=pl.BlockSpec((block_rows, tc), lambda i, j, bs: (i, j)),
        ),
        compiler_params=pltpu.CompilerParams(
            dimension_semantics=("parallel", "parallel"),
            vmem_limit_bytes=_VMEM_LIMIT_BYTES,
        ),
    )(bs_arr, x, scale_ib, shift_ib, scale_ob, shift_ob)


# ----------------------------------------------------------------------------
# Public forward
# ----------------------------------------------------------------------------
def double_bn_forward(x, gamma_ib, beta_ib, gamma_ob, beta_ob, batch_size=None,
                      *, eps=1e-5, force_two_pass=False, block_rows=None):
    """Training-mode DoubleBN forward. batch_size=None -> single BN (ib params)."""
    m, c = x.shape
    if m == 0:
        return x
    bs_val = m if batch_size is None else batch_size
    bs_arr = jnp.asarray([bs_val], dtype=jnp.int32)

    # Lane-dense layout: pad feature dim up to a multiple of 128 (zeros are
    # harmless for per-feature stats; padded columns are sliced off at the end).
    c_pad = _round_up(c, _LANE)
    xp = _pad_cols(x, c_pad)
    gib = _pad_cols(gamma_ib.reshape(1, c), c_pad)
    bib = _pad_cols(beta_ib.reshape(1, c), c_pad)
    gob = _pad_cols(gamma_ob.reshape(1, c), c_pad)
    bob = _pad_cols(beta_ob.reshape(1, c), c_pad)

    tc = _choose_tc(c_pad)
    if m * tc > _SINGLE_PASS_MAX_BLOCK_ELEMS and m * _LANE <= _SINGLE_PASS_MAX_BLOCK_ELEMS:
        tc = _LANE  # shrink lane tile before giving up on the single pass
    use_two_pass = force_two_pass or (m * tc > _SINGLE_PASS_MAX_BLOCK_ELEMS)

    if use_two_pass:
        tm = block_rows
        if tm is None:
            tm = max(8, min(1024, (_SINGLE_PASS_MAX_BLOCK_ELEMS // tc) // 8 * 8))
        tm = _round_up(tm, 8)
        out = _two_pass(xp, gib, bib, gob, bob, bs_arr, eps=eps, tc=tc, block_rows=tm)
    else:
        out = _single_pass(xp, gib, bib, gob, bob, bs_arr, eps=eps, tc=tc)

    if c_pad != c:
        out = out[:, :c]
    return out


class DoubleBNPallas:
    """JAX/Pallas equivalent of the PyTorch DoubleBN module (forward only).

    # TODO(synk): running_mean/running_var/momentum bookkeeping of BatchNorm1d
    # (used for eval mode) is stateful and not part of this functional forward.
    """

    def __init__(self, num_features, key, eps=1e-5, dtype=jnp.float32):
        self.num_features = num_features
        self.eps = eps
        k1, k2, k3, k4 = jax.random.split(key, 4)
        self.gamma_ib = jax.random.uniform(k1, (num_features,), dtype, 0.5, 1.5)
        self.beta_ib = 0.1 * jax.random.normal(k2, (num_features,), dtype)
        self.gamma_ob = jax.random.uniform(k3, (num_features,), dtype, 0.5, 1.5)
        self.beta_ob = 0.1 * jax.random.normal(k4, (num_features,), dtype)

    def __call__(self, x, batch_size=None, *, force_two_pass=False, block_rows=None):
        return double_bn_forward(
            x, self.gamma_ib, self.beta_ib, self.gamma_ob, self.beta_ob,
            batch_size, eps=self.eps,
            force_two_pass=force_two_pass, block_rows=block_rows)


# ----------------------------------------------------------------------------
# Pure-JAX reference + tests
# ----------------------------------------------------------------------------
def _bn_ref(x, gamma, beta, eps=1e-5):
    x32 = x.astype(jnp.float32)
    mean = jnp.mean(x32, axis=0, keepdims=True)
    var = jnp.mean((x32 - mean) ** 2, axis=0, keepdims=True)
    return ((x32 - mean) * jax.lax.rsqrt(var + eps) * gamma + beta).astype(x.dtype)


def _double_bn_ref(x, gib, bib, gob, bob, batch_size=None, eps=1e-5):
    if batch_size is None or batch_size >= x.shape[0]:
        return _bn_ref(x, gib, bib, eps)
    return jnp.concatenate(
        [_bn_ref(x[:batch_size], gib, bib, eps),
         _bn_ref(x[batch_size:], gob, bob, eps)], axis=0)


if __name__ == "__main__":
    key = jax.random.PRNGKey(0)
    kx, kp, kx2, kp2 = jax.random.split(key, 4)

    # --- Test 1: small shapes (N=8 rows, C=32 features), single-pass path ---
    N, C = 8, 32
    batch_size = 5
    x = jax.random.normal(kx, (N, C), jnp.float32)
    model = DoubleBNPallas(C, kp)

    out_none = model(x, batch_size=None)
    jax.block_until_ready(out_none)
    ref_none = _double_bn_ref(x, model.gamma_ib, model.beta_ib,
                              model.gamma_ob, model.beta_ob, None)
    assert jnp.allclose(out_none, ref_none, atol=1e-5, rtol=1e-5)

    out_split = model(x, batch_size=batch_size)
    jax.block_until_ready(out_split)
    ref_split = _double_bn_ref(x, model.gamma_ib, model.beta_ib,
                               model.gamma_ob, model.beta_ob, batch_size)
    assert out_split.shape == (N, C)
    assert jnp.allclose(out_split, ref_split, atol=1e-5, rtol=1e-5)

    # Edge case: batch_size == N (empty out-of-batch segment) must not crash.
    out_full = model(x, batch_size=N)
    jax.block_until_ready(out_full)
    assert jnp.allclose(out_full, _bn_ref(x, model.gamma_ib, model.beta_ib),
                        atol=1e-5, rtol=1e-5)

    # --- Test 2: multiple feature tiles + ragged rows; both paths ------------
    N2, C2, BS2 = 37, 300, 17
    x2 = jax.random.normal(kx2, (N2, C2), jnp.float32)
    model2 = DoubleBNPallas(C2, kp2)
    ref2 = _double_bn_ref(x2, model2.gamma_ib, model2.beta_ib,
                          model2.gamma_ob, model2.beta_ob, BS2)

    out2_single = model2(x2, BS2)
    jax.block_until_ready(out2_single)
    assert jnp.allclose(out2_single, ref2, atol=1e-5, rtol=1e-5)

    out2_two = model2(x2, BS2, force_two_pass=True, block_rows=8)
    jax.block_until_ready(out2_two)
    assert jnp.allclose(out2_two, ref2, atol=1e-4, rtol=1e-4)

    print("KERNEL_OK")
</pallas_src>

<mosaic_0001>
module attributes {stable_mosaic.version = 11 : i64} {
  func.func @_fused_bn_kernel(%arg0: i32, %arg1: memref<1xi32, #tpu.memory_space<smem>>, %arg2: memref<8x128xf32, #tpu.memory_space<vmem>>, %arg3: memref<1x128xf32, #tpu.memory_space<vmem>>, %arg4: memref<1x128xf32, #tpu.memory_space<vmem>>, %arg5: memref<1x128xf32, #tpu.memory_space<vmem>>, %arg6: memref<1x128xf32, #tpu.memory_space<vmem>>, %arg7: memref<8x128xf32, #tpu.memory_space<vmem>>) attributes {dimension_semantics = [#tpu.dimension_semantics<parallel>], iteration_bounds = array<i64: 1>, scalar_prefetch = 1 : i64, scratch_operands = 0 : i64, tpu.core_type = #tpu.core_type<tc>, window_params = [{transform_indices = @transform_0, window_bounds = array<i64: 8, 128>}, {transform_indices = @transform_1, window_bounds = array<i64: 1, 128>}, {transform_indices = @transform_2, window_bounds = array<i64: 1, 128>}, {transform_indices = @transform_3, window_bounds = array<i64: 1, 128>}, {transform_indices = @transform_4, window_bounds = array<i64: 1, 128>}, {transform_indices = @transform_5, window_bounds = array<i64: 8, 128>}]} {
    %c0 = arith.constant 0 : index
    %c0_0 = arith.constant 0 : index
    %0 = vector.load %arg2[%c0, %c0_0] : memref<8x128xf32, #tpu.memory_space<vmem>>, vector<8x128xf32>
    %c0_1 = arith.constant 0 : index
    %1 = memref.load %arg1[%c0_1] : memref<1xi32, #tpu.memory_space<smem>>
    %2 = tpu.iota {dimensions = array<i32: 0>} : vector<8x128xi32>
    %3 = vector.broadcast %1 : i32 to vector<8x128xi32>
    %4 = arith.cmpi slt, %2, %3 : vector<8x128xi32>
    %c0_i32 = arith.constant 0 : i32
    %c8_i32 = arith.constant 8 : i32
    %5 = arith.maxsi %c0_i32, %1 : i32
    %6 = arith.minsi %c8_i32, %5 : i32
    %c1_i32 = arith.constant 1 : i32
    %7 = arith.maxsi %6, %c1_i32 : i32
    %8 = arith.sitofp %7 : i32 to f32
    %c8_i32_2 = arith.constant 8 : i32
    %9 = arith.subi %c8_i32_2, %6 : i32
    %c1_i32_3 = arith.constant 1 : i32
    %10 = arith.maxsi %9, %c1_i32_3 : i32
    %11 = arith.sitofp %10 : i32 to f32
    %cst = arith.constant 0.000000e+00 : f32
    %12 = vector.broadcast %cst : f32 to vector<8x128xf32>
    %13 = arith.select %4, %0, %12 : vector<8x128xi1>, vector<8x128xf32>
    %14 = arith.subf %0, %13 : vector<8x128xf32>
    %cst_4 = arith.constant dense<0.000000e+00> : vector<128xf32>
    %15 = vector.multi_reduction <add>, %13, %cst_4 [0] : vector<8x128xf32> to vector<128xf32>
    %16 = vector.shape_cast %15 : vector<128xf32> to vector<1x128xf32>
    %17 = vector.broadcast %8 : f32 to vector<1x128xf32>
    %18 = arith.divf %16, %17 : vector<1x128xf32>
    %cst_5 = arith.constant dense<0.000000e+00> : vector<128xf32>
    %19 = vector.multi_reduction <add>, %14, %cst_5 [0] : vector<8x128xf32> to vector<128xf32>
    %20 = vector.shape_cast %19 : vector<128xf32> to vector<1x128xf32>
    %21 = vector.broadcast %11 : f32 to vector<1x128xf32>
    %22 = arith.divf %20, %21 : vector<1x128xf32>
    %23 = vector.broadcast %18 : vector<1x128xf32> to vector<8x128xf32>
    %24 = arith.subf %0, %23 : vector<8x128xf32>
    %cst_6 = arith.constant 0.000000e+00 : f32
    %25 = vector.broadcast %cst_6 : f32 to vector<8x128xf32>
    %26 = arith.select %4, %24, %25 : vector<8x128xi1>, vector<8x128xf32>
    %27 = vector.broadcast %22 : vector<1x128xf32> to vector<8x128xf32>
    %28 = arith.subf %0, %27 : vector<8x128xf32>
    %cst_7 = arith.constant 0.000000e+00 : f32
    %29 = vector.broadcast %cst_7 : f32 to vector<8x128xf32>
    %30 = arith.select %4, %29, %28 : vector<8x128xi1>, vector<8x128xf32>
    %31 = arith.mulf %26, %26 : vector<8x128xf32>
    %cst_8 = arith.constant dense<0.000000e+00> : vector<128xf32>
    %32 = vector.multi_reduction <add>, %31, %cst_8 [0] : vector<8x128xf32> to vector<128xf32>
    %33 = vector.shape_cast %32 : vector<128xf32> to vector<1x128xf32>
    %34 = vector.broadcast %8 : f32 to vector<1x128xf32>
    %35 = arith.divf %33, %34 : vector<1x128xf32>
    %36 = arith.mulf %30, %30 : vector<8x128xf32>
    %cst_9 = arith.constant dense<0.000000e+00> : vector<128xf32>
    %37 = vector.multi_reduction <add>, %36, %cst_9 [0] : vector<8x128xf32> to vector<128xf32>
    %38 = vector.shape_cast %37 : vector<128xf32> to vector<1x128xf32>
    %39 = vector.broadcast %11 : f32 to vector<1x128xf32>
    %40 = arith.divf %38, %39 : vector<1x128xf32>
    %cst_10 = arith.constant 9.99999974E-6 : f32
    %41 = vector.broadcast %cst_10 : f32 to vector<1x128xf32>
    %42 = arith.addf %35, %41 : vector<1x128xf32>
    %43 = math.rsqrt %42 : vector<1x128xf32>
    %c0_11 = arith.constant 0 : index
    %c0_12 = arith.constant 0 : index
    %44 = vector.load %arg3[%c0_11, %c0_12] : memref<1x128xf32, #tpu.memory_space<vmem>>, vector<1x128xf32>
    %45 = arith.mulf %43, %44 : vector<1x128xf32>
    %c0_13 = arith.constant 0 : index
    %c0_14 = arith.constant 0 : index
    %46 = vector.load %arg4[%c0_13, %c0_14] : memref<1x128xf32, #tpu.memory_space<vmem>>, vector<1x128xf32>
    %47 = arith.mulf %18, %45 : vector<1x128xf32>
    %48 = arith.subf %46, %47 : vector<1x128xf32>
    %cst_15 = arith.constant 9.99999974E-6 : f32
    %49 = vector.broadcast %cst_15 : f32 to vector<1x128xf32>
    %50 = arith.addf %40, %49 : vector<1x128xf32>
    %51 = math.rsqrt %50 : vector<1x128xf32>
    %c0_16 = arith.constant 0 : index
    %c0_17 = arith.constant 0 : index
    %52 = vector.load %arg5[%c0_16, %c0_17] : memref<1x128xf32, #tpu.memory_space<vmem>>, vector<1x128xf32>
    %53 = arith.mulf %51, %52 : vector<1x128xf32>
    %c0_18 = arith.constant 0 : index
    %c0_19 = arith.constant 0 : index
    %54 = vector.load %arg6[%c0_18, %c0_19] : memref<1x128xf32, #tpu.memory_space<vmem>>, vector<1x128xf32>
    %55 = arith.mulf %22, %53 : vector<1x128xf32>
    %56 = arith.subf %54, %55 : vector<1x128xf32>
    %57 = vector.shape_cast %45 : vector<1x128xf32> to vector<1x128xf32>
    %58 = vector.broadcast %57 : vector<1x128xf32> to vector<8x128xf32>
    %59 = vector.shape_cast %53 : vector<1x128xf32> to vector<1x128xf32>
    %60 = vector.broadcast %59 : vector<1x128xf32> to vector<8x128xf32>
    %61 = arith.select %4, %58, %60 : vector<8x128xi1>, vector<8x128xf32>
    %62 = vector.shape_cast %48 : vector<1x128xf32> to vector<1x128xf32>
    %63 = vector.broadcast %62 : vector<1x128xf32> to vector<8x128xf32>
    %64 = vector.shape_cast %56 : vector<1x128xf32> to vector<1x128xf32>
    %65 = vector.broadcast %64 : vector<1x128xf32> to vector<8x128xf32>
    %66 = arith.select %4, %63, %65 : vector<8x128xi1>, vector<8x128xf32>
    %67 = arith.mulf %0, %61 : vector<8x128xf32>
    %68 = arith.addf %67, %66 : vector<8x128xf32>
    %c0_20 = arith.constant 0 : index
    %c0_21 = arith.constant 0 : index
    %69 = vector.load %arg7[%c0_20, %c0_21] : memref<8x128xf32, #tpu.memory_space<vmem>>, vector<8x128xf32>
    tpu.vector_store %arg7[%c0_20, %c0_21], %68 {strides = array<i32>} : memref<8x128xf32, #tpu.memory_space<vmem>>, vector<8x128xf32>,
    return
  }
  func.func @transform_0(%arg0: i32, %arg1: memref<1xi32, #tpu.memory_space<smem>>) -> (i32, i32) {
    %c0_i32 = arith.constant 0 : i32
    %c0_i32_0 = arith.constant 0 : i32
    return %c0_i32, %arg0 : i32, i32
  }
  func.func @transform_1(%arg0: i32, %arg1: memref<1xi32, #tpu.memory_space<smem>>) -> (i32, i32) {
    %c0_i32 = arith.constant 0 : i32
    %c0_i32_0 = arith.constant 0 : i32
    return %c0_i32, %arg0 : i32, i32
  }
  func.func @transform_2(%arg0: i32, %arg1: memref<1xi32, #tpu.memory_space<smem>>) -> (i32, i32) {
    %c0_i32 = arith.constant 0 : i32
    %c0_i32_0 = arith.constant 0 : i32
    return %c0_i32, %arg0 : i32, i32
  }
  func.func @transform_3(%arg0: i32, %arg1: memref<1xi32, #tpu.memory_space<smem>>) -> (i32, i32) {
    %c0_i32 = arith.constant 0 : i32
    %c0_i32_0 = arith.constant 0 : i32
    return %c0_i32, %arg0 : i32, i32
  }
  func.func @transform_4(%arg0: i32, %arg1: memref<1xi32, #tpu.memory_space<smem>>) -> (i32, i32) {
    %c0_i32 = arith.constant 0 : i32
    %c0_i32_0 = arith.constant 0 : i32
    return %c0_i32, %arg0 : i32, i32
  }
  func.func @transform_5(%arg0: i32, %arg1: memref<1xi32, #tpu.memory_space<smem>>) -> (i32, i32) {
    %c0_i32 = arith.constant 0 : i32
    %c0_i32_0 = arith.constant 0 : i32
    return %c0_i32, %arg0 : i32, i32
  }
}

</mosaic_0001>

<llo_original>
// kernel: tpu_custom_call.1
$region0: #{tpu_custom_call.1}
  #allocation0 [shape = 'u32[]', space=smem, size = 0x4, offset = 0x4, fixed_abs, tag = 'smem constant byte address 0x4 - core index']
  #allocation1 [shape = 'u32[144,128]{1,0:T(1,128)}', space=vmem, size = 0x12000, scoped, tag = 'internal scratch']
  #allocation2 [shape = 's32[1]{0}', space=sflag, size = 0x4, scoped, tag = 'scoped memory for tpu_custom_call.1']
  #allocation3 [shape = 's32[1]{0:T(128)S(6)}', space=smem, size = 0x200, scoped, tag = 'prefetched SMEM operand 0']
  %s0 = inlined_call_operand.<no memory space> [shape: s32[1], index: 0, kind: input, shape index: {}]
  %s1 = inlined_call_operand.hbm [shape: f32[8,128], index: 1, kind: input, shape index: {}]
  %s2 = inlined_call_operand.vmem [shape: f32[1,128], index: 2, kind: input, shape index: {}]
  %s3 = inlined_call_operand.vmem [shape: f32[1,128], index: 3, kind: input, shape index: {}]
  %s4 = inlined_call_operand.vmem [shape: f32[1,128], index: 4, kind: input, shape index: {}]
  %s5 = inlined_call_operand.vmem [shape: f32[1,128], index: 5, kind: input, shape index: {}]
  %s6 = inlined_call_operand.hbm [shape: f32[8,128], index: 6, kind: output, shape index: {}]
  %s7 = sld [smem:[#allocation0]]
  $region34: #{tpu_custom_call.1} parent=0
    _
  %s9 = ssub.s32 1, %s7
  %s10 = scalar_select 0, %s9, %s7
  %11 = sst [smem:[#allocation3]] %s0
  $region1: #{tpu_custom_call.1} parent=0
    #allocation4 [shape = 'u8[4096]{0}', space=vmem, size = 0x1000, scoped, tag = 'input window, operand 1, single buffered']
    #allocation5 [shape = 's32[1]{0}', space=sflag, size = 0x4, scoped, tag = 'scoped memory for tpu_custom_call.1']
    #allocation6 [shape = 's32[1]{0}', space=sflag, size = 0x4, scoped, tag = 'scoped memory for tpu_custom_call.1']
    #allocation7 [shape = 'u8[4096]{0}', space=vmem, size = 0x1000, scoped, tag = 'output window, operand 0, single buffered']
    %12 = vsyncpa [#allocation5], 0
    %13 = vsyncpa [#allocation6], 0
    // Predicated region
    $region2: #{tpu_custom_call.1} parent=1 // pred_check
      _
    $region3: #{tpu_custom_call.1} parent=1 // pred_check_branch
      %15 = sbr.rel (0) target = $region5
    $region4: #{tpu_custom_call.1} parent=1 // pred_region
      %s17 = ssub.s32 128, 128
      %18 = vsyncadd [#allocation5], %s17
      %s20 = sshll.u32 [#allocation4], 4
      %s21 = int_to_ptr.vmem [resolvable:$true] %s20
      %23 = dma.hbm_to_vmem [thread:$0]  %s1, 128, %s21, [#allocation5]
    $region5: #{tpu_custom_call.1} parent=1 // pred_fallthru
      _
    // Predicated region
    $region6: #{tpu_custom_call.1} parent=1 // pred_check
      _
    $region7: #{tpu_custom_call.1} parent=1 // pred_check_branch
      %25 = sbr.rel (0) target = $region9
    $region8: #{tpu_custom_call.1} parent=1 // pred_region
      _
    $region9: #{tpu_custom_call.1} parent=1 // pred_fallthru
      _
    // Predicated region
    $region10: #{tpu_custom_call.1} parent=1 // pred_check
      _
    $region11: #{tpu_custom_call.1} parent=1 // pred_check_branch
      %27 = sbr.rel (0) target = $region13
    $region12: #{tpu_custom_call.1} parent=1 // pred_region
      _
    $region13: #{tpu_custom_call.1} parent=1 // pred_fallthru
      _
    // Predicated region
    $region14: #{tpu_custom_call.1} parent=1 // pred_check
      _
    $region15: #{tpu_custom_call.1} parent=1 // pred_check_branch
      %29 = sbr.rel (0) target = $region17
    $region16: #{tpu_custom_call.1} parent=1 // pred_region
      _
    $region17: #{tpu_custom_call.1} parent=1 // pred_fallthru
      _
    // Predicated region
    $region18: #{tpu_custom_call.1} parent=1 // pred_check
      _
    $region19: #{tpu_custom_call.1} parent=1 // pred_check_branch
      %31 = sbr.rel (0) target = $region21
    $region20: #{tpu_custom_call.1} parent=1 // pred_region
      _
    $region21: #{tpu_custom_call.1} parent=1 // pred_fallthru
      _
    // Predicated region
    $region22: #{tpu_custom_call.1} parent=1 // pred_check
      _
    $region23: #{tpu_custom_call.1} parent=1 // pred_check_branch
      %33 = sbr.rel (0) target = $region25
    $region24: #{tpu_custom_call.1} parent=1 // pred_region
      %34 = dma.done [#allocation5], 128
    $region25: #{tpu_custom_call.1} parent=1 // pred_fallthru
      _
    %v35 = vld [vmem:[#allocation4] sm:$0xff]
    %s36 = sld [smem:[#allocation3]]
    %v37 = vlaneseq
    %v38 = vshrl.u32 %v37, 7
    %v39 = vstv %s36
    %vm40 = vcmp.lt.s32.totalorder %v38, %v39
    %p41 = scmp.gt.s32.totalorder %s36, 0
    %s42 = scalar_select %p41, %s36, 0
    %p43 = scmp.lt.s32.totalorder %s42, 8
    %s44 = scalar_select %p43, %s42, 8
    %p45 = scmp.gt.s32.totalorder %s44, 1
    %s46 = scalar_select %p45, %s44, 1
    %s47 = scvt.s32.f32 %s46
    %s48 = ssub.s32 8, %s44
    %p49 = scmp.gt.s32.totalorder %s48, 1
    %s50 = scalar_select %p49, %s48, 1
    %s51 = scvt.s32.f32 %s50
    %v52 = vsel %vm40, %v35, 0.0
    %v53 = vsub.f32 %v35, %v52
    %v54 = vrot.slane %v52, 4
    %v55 = vadd.f32 %v52, %v54
    %v56 = vrot.slane %v55, 2
    %v57 = vadd.f32 %v55, %v56
    %v58 = vrot.slane %v57, 1
    %v59 = vadd.f32 %v57, %v58
    %v60 = vstv %s47
    %v61 = vrcp.pop %v60
    %v62 = vmul.f32 %v59, %v61
    %v63 = vrot.slane %v53, 4
    %v64 = vadd.f32 %v53, %v63
    %v65 = vrot.slane %v64, 2
    %v66 = vadd.f32 %v64, %v65
    %v67 = vrot.slane %v66, 1
    %v68 = vadd.f32 %v66, %v67
    %v69 = vstv %s51
    %v70 = vrcp.pop %v69
    %v71 = vmul.f32 %v68, %v70
    %v72 = vsub.f32 %v35, %v62
    %v73 = vsel %vm40, %v72, 0.0
    %v74 = vsub.f32 %v35, %v71
    %v75 = vsel %vm40, 0.0, %v74
    %v76 = vmul.f32 %v73, %v73
    %v77 = vrot.slane %v76, 4
    %v78 = vadd.f32 %v76, %v77
    %v79 = vrot.slane %v78, 2
    %v80 = vadd.f32 %v78, %v79
    %v81 = vrot.slane %v80, 1
    %v82 = vadd.f32 %v80, %v81
    %v83 = vmul.f32 %v82, %v61
    %v84 = vmul.f32 %v75, %v75
    %v85 = vrot.slane %v84, 4
    %v86 = vadd.f32 %v84, %v85
    %v87 = vrot.slane %v86, 2
    %v88 = vadd.f32 %v86, %v87
    %v89 = vrot.slane %v88, 1
    %v90 = vadd.f32 %v88, %v89
    %v91 = vmul.f32 %v90, %v70
    %v92 = vadd.f32 %v83, 1e-05
    %v93 = vrsqrt.pop %v92
    %v94 = vld [vmem:[%s2] sm:$0x1]
    %v95 = vmul.f32 %v93, %v94
    %v96 = vld [vmem:[%s3] sm:$0x1]
    %v97 = vmul.f32 %v62, %v95
    %v98 = vsub.f32 %v96, %v97
    %v99 = vadd.f32 %v91, 1e-05
    %v100 = vrsqrt.pop %v99
    %v101 = vld [vmem:[%s4] sm:$0x1]
    %v102 = vmul.f32 %v100, %v101
    %v103 = vld [vmem:[%s5] sm:$0x1]
    %v104 = vmul.f32 %v71, %v102
    %v105 = vsub.f32 %v103, %v104
    %v106 = vlaneseq
    %v107 = vshrl.u32 %v106, 7
    %v108 = vsub.s32 0, %v107
    %v109 = vrot.slane %v95, %v108
    %v110 = vlaneseq
    %v111 = vshrl.u32 %v110, 7
    %v112 = vsub.s32 0, %v111
    %v113 = vrot.slane %v102, %v112
    %v114 = vsel %vm40, %v109, %v113
    %v116 = vlaneseq
    %v117 = vshrl.u32 %v116, 7
    %v118 = vsub.s32 0, %v117
    %v119 = vrot.slane %v98, %v118
    %v122 = vlaneseq
    %v123 = vshrl.u32 %v122, 7
    %v124 = vsub.s32 0, %v123
    %v125 = vrot.slane %v105, %v124
    %v127 = vsel %vm40, %v119, %v125
    %v128 = vmul.f32 %v35, %v114
    %v129 = vadd.f32 %v128, %v127
    %130 = vst [vmem:[#allocation7] sm:$0xff] %v129
    // Predicated region
    $region26: #{tpu_custom_call.1} parent=1 // pred_check
      _
    $region27: #{tpu_custom_call.1} parent=1 // pred_check_branch
      %132 = sbr.rel (0) target = $region29
    $region28: #{tpu_custom_call.1} parent=1 // pred_region
      %s134 = ssub.s32 128, 128
      %135 = vsyncadd [#allocation6], %s134
      %s137 = sshll.u32 [#allocation7], 4
      %s138 = int_to_ptr.vmem [resolvable:$true] %s137
      %140 = dma.vmem_to_hbm [thread:$0]  %s138, 128, %s6, [#allocation6]
    $region29: #{tpu_custom_call.1} parent=1 // pred_fallthru
      _
    // Predicated region
    $region30: #{tpu_custom_call.1} parent=1 // pred_check
      _
    $region31: #{tpu_custom_call.1} parent=1 // pred_check_branch
      %142 = sbr.rel (0) target = $region33
    $region32: #{tpu_custom_call.1} parent=1 // pred_region
      %143 = dma.done [#allocation6], 128
    $region33: #{tpu_custom_call.1} parent=1 // pred_fallthru
      _
    %144 = vsyncpa [#allocation5], 1
    %145 = vsyncpa [#allocation6], 1

</llo_original>
